<compile_context>
chip_gen: v7x
topology: tpu7x:2x2x1
jax: 0.10.0
libtpu: 0.0.40
codegen_flags: <defaults>
</compile_context>

<pallas_src>
import numpy as np
import jax
import jax.numpy as jnp
from jax.experimental import pallas as pl
from jax.experimental.pallas import tpu as pltpu

NEG_SLOPE = 0.15      # nn.LeakyReLU(0.15)
BN_EPS = 1e-5         # nn.BatchNorm1d default eps


def _leaky(x):
    return jnp.where(x > 0, x, NEG_SLOPE * x)


def eer_gcn_kernel(x_ref, g_ref, t_ref, m_ref, wmix_ref, chebbt_ref,
                   gamma_ref, beta_ref, w1_ref, b1_ref, w2_ref, b2_ref,
                   yoh_ref, loss_ref, logits_ref, cat_ref):
    x = x_ref[...]                                   # (B, N*F)  lane dim = N*F
    B, NF = x.shape
    F = gamma_ref.shape[1]
    N = NF // F
    K = cat_ref.shape[1] // NF
    inv_cnt = 1.0 / float(B * N)

    # ---- BatchNorm1d (training-mode batch stats), single fused pass ----
    col_s1 = jnp.sum(x, axis=0, keepdims=True)       # (1, N*F)
    col_s2 = jnp.sum(x * x, axis=0, keepdims=True)   # (1, N*F)
    # group per-node columns down to per-feature sums with a 0/1 matrix (MXU)
    s1 = jnp.dot(col_s1, g_ref[...], preferred_element_type=jnp.float32)  # (1, F)
    s2 = jnp.dot(col_s2, g_ref[...], preferred_element_type=jnp.float32)  # (1, F)
    mean = s1 * inv_cnt
    var = s2 * inv_cnt - mean * mean                 # biased var (PyTorch norm)
    scale = gamma_ref[...] * jax.lax.rsqrt(var + BN_EPS)   # (1, F)
    shift = beta_ref[...] - mean * scale                    # (1, F)
    # tile per-feature scale/shift back to (1, N*F) columns (MXU)
    scale_t = jnp.dot(scale, t_ref[...], preferred_element_type=jnp.float32)
    shift_t = jnp.dot(shift, t_ref[...], preferred_element_type=jnp.float32)
    xn = _leaky(x * scale_t + shift_t)               # (B, N*F)

    # ---- ChebConv: recursion in the flat layout; one matmul per prop step ----
    # prop(t) = t @ M with M = kron(L_hat^T, I_F)  (host-built)
    M = m_ref[...]                                   # (N*F, N*F)
    cat_ref[:, 0:NF] = xn                            # T_0
    tx0 = xn
    if K > 1:
        tx1 = jnp.dot(xn, M, preferred_element_type=jnp.float32)
        cat_ref[:, NF:2 * NF] = tx1                  # T_1
        for k in range(2, K):
            tx2 = 2.0 * jnp.dot(tx1, M, preferred_element_type=jnp.float32) - tx0
            cat_ref[:, k * NF:(k + 1) * NF] = tx2    # T_k
            tx0, tx1 = tx1, tx2

    # ---- fused mix of all K terms: ONE (B, K*N*F) @ (K*N*F, N*H) matmul.
    # W_mix is block-diagonal over nodes, so the result is already the
    # (B, N*H) node-major/hidden-minor flatten that fc1 expects.
    out = jnp.dot(cat_ref[...], wmix_ref[...], preferred_element_type=jnp.float32)
    out = _leaky(out + chebbt_ref[...])              # (B, N*H)

    # ---- fc1 (single 128-contraction matmul) -> LeakyReLU -> fc2 ----
    h1 = jnp.dot(out, w1_ref[...], preferred_element_type=jnp.float32) + b1_ref[...]
    h1 = _leaky(h1)
    z = jnp.dot(h1, w2_ref[...], preferred_element_type=jnp.float32) + b2_ref[...]

    # ---- softmax probabilities + CrossEntropyLoss (mean reduction) ----
    m = jnp.max(z, axis=1, keepdims=True)
    e = jnp.exp(z - m)
    s = jnp.sum(e, axis=1, keepdims=True)
    logits_ref[...] = e * pl.reciprocal(s, approx=True)   # EUP divide (probs)
    log_probs = (z - m) - jnp.log(s)                       # exact log for loss
    per_ex = -jnp.sum(yoh_ref[...] * log_probs, axis=1, keepdims=True)  # (B, 1)
    loss_ref[...] = jnp.sum(per_ex, axis=0, keepdims=True) * (1.0 / float(B))


def eer_gcn_forward(x_bnf, l_hat, cheb_w, cheb_b, gamma, beta,
                    w1_flat, b1, w2, b2, y_onehot):
    B, N, F = x_bnf.shape
    K, _, H = cheb_w.shape
    C = w2.shape[-1]

    # ---- host-side layout plumbing (parameters / graph only) ----
    x2 = x_bnf.reshape(B, N * F)                                    # (B, N*F)
    eye_f = jnp.eye(F, dtype=jnp.float32)
    t_tile = jnp.tile(eye_f, (1, N))                                # (F, N*F)
    g_group = t_tile.T                                              # (N*F, F)
    m_prop = jnp.kron(l_hat.T, eye_f)                               # (N*F, N*F)
    w_mix = jnp.concatenate(
        [jnp.kron(jnp.eye(N, dtype=jnp.float32), cheb_w[k]) for k in range(K)],
        axis=0)                                                     # (K*N*F, N*H)
    chebb_t = jnp.tile(cheb_b, (1, N))                              # (1, N*H)

    vmem = pl.BlockSpec(memory_space=pltpu.MemorySpace.VMEM)
    loss, logits = pl.pallas_call(
        eer_gcn_kernel,
        out_shape=(jax.ShapeDtypeStruct((1, 1), jnp.float32),
                   jax.ShapeDtypeStruct((B, C), jnp.float32)),
        in_specs=[vmem] * 13,
        out_specs=(vmem, vmem),
        scratch_shapes=[pltpu.VMEM((B, K * N * F), jnp.float32)],
    )(x2, g_group, t_tile, m_prop, w_mix, chebb_t, gamma, beta,
      w1_flat, b1, w2, b2, y_onehot)
    return loss[0, 0], logits


def reference(x, l_hat, cheb_w, cheb_b, gamma, beta, w1_flat, b1, w2, b2, y_onehot):
    # Pure-JAX reference mirroring the PyTorch forward semantics.
    B, N, F = x.shape
    xf = x.reshape(B * N, F)
    mean = xf.mean(0)
    var = ((xf - mean) ** 2).mean(0)
    xn = (xf - mean) / jnp.sqrt(var + BN_EPS) * gamma[0] + beta[0]
    xn = jnp.where(xn > 0, xn, NEG_SLOPE * xn).reshape(B, N, F)
    tx0 = xn
    out = jnp.einsum('bnf,fh->bnh', tx0, cheb_w[0])
    tx1 = jnp.einsum('ij,bjf->bif', l_hat, tx0)
    out = out + jnp.einsum('bnf,fh->bnh', tx1, cheb_w[1])
    for k in range(2, cheb_w.shape[0]):
        tx2 = 2.0 * jnp.einsum('ij,bjf->bif', l_hat, tx1) - tx0
        out = out + jnp.einsum('bnf,fh->bnh', tx2, cheb_w[k])
        tx0, tx1 = tx1, tx2
    out = out + cheb_b[0]
    out = jnp.where(out > 0, out, NEG_SLOPE * out)
    flat = out.reshape(B, -1)
    h1 = flat @ w1_flat + b1[0]
    h1 = jnp.where(h1 > 0, h1, NEG_SLOPE * h1)
    z = h1 @ w2 + b2[0]
    logits = jax.nn.softmax(z, axis=1)
    logp = jax.nn.log_softmax(z, axis=1)
    loss = -jnp.mean(jnp.sum(y_onehot * logp, axis=1))
    return loss, logits


if __name__ == "__main__":
    # Small shapes consistent with the module's constructor.
    num_nodes, num_features = 8, 4
    hid_channels, fc1_out, out_channels = 16, 32, 3
    K, batch_size = 3, 2

    key = jax.random.PRNGKey(0)
    keys = jax.random.split(key, 9)

    # ---- graph setup (glue): fully-connected undirected graph, symmetric weights ----
    M_rand = np.array(jax.random.normal(keys[0], (num_nodes, num_nodes), jnp.float32))
    A_raw = (M_rand + M_rand.T) / 2.0
    np.fill_diagonal(A_raw, 0.0)       # edge_weight (nn.Parameter) as dense symmetric adjacency

    # LaplacianLambdaMax(normalization=None): L = D - A from *raw* edge weights.
    # TODO(synk): eigen-decomposition has no Pallas equivalent; done on host.
    L_raw = np.diag(A_raw.sum(1)) - A_raw
    lambda_max = float(np.max(np.linalg.eigvalsh(L_raw)))

    # ChebConv receives leakyrelu(edge_attr) as edge weights.
    A_act = np.where(A_raw > 0, A_raw, NEG_SLOPE * A_raw)
    np.fill_diagonal(A_act, 0.0)
    L_act = np.diag(A_act.sum(1)) - A_act
    L_hat = (2.0 / lambda_max) * L_act - np.eye(num_nodes)
    L_hat = jnp.asarray(L_hat, jnp.float32)

    # ---- deterministic synthetic parameters ----
    cheb_w = 0.2 * jax.random.normal(keys[1], (K, num_features, hid_channels), jnp.float32)
    cheb_b = 0.05 * jax.random.normal(keys[2], (1, hid_channels), jnp.float32)
    gamma = jnp.ones((1, num_features), jnp.float32)        # BatchNorm1d weight
    beta = jnp.zeros((1, num_features), jnp.float32)        # BatchNorm1d bias
    fc1_in = hid_channels * num_nodes
    w1_flat = 0.1 * jax.random.normal(keys[3], (fc1_in, fc1_out), jnp.float32)   # fc1 weight^T
    b1 = 0.05 * jax.random.normal(keys[4], (1, fc1_out), jnp.float32)
    w2 = 0.1 * jax.random.normal(keys[5], (fc1_out, out_channels), jnp.float32)  # fc2 weight^T
    b2 = 0.05 * jax.random.normal(keys[6], (1, out_channels), jnp.float32)

    # ---- inputs ----
    x = jax.random.normal(keys[7], (batch_size, num_nodes, num_features), jnp.float32)
    y = jax.random.randint(keys[8], (batch_size,), 0, out_channels)
    y_onehot = jax.nn.one_hot(y, out_channels, dtype=jnp.float32)

    loss, logits = eer_gcn_forward(x, L_hat, cheb_w, cheb_b, gamma, beta,
                                   w1_flat, b1, w2, b2, y_onehot)
    jax.block_until_ready((loss, logits))

    loss_ref, logits_ref = reference(x, L_hat, cheb_w, cheb_b, gamma, beta,
                                     w1_flat, b1, w2, b2, y_onehot)
    np.testing.assert_allclose(np.asarray(logits), np.asarray(logits_ref),
                               rtol=1e-2, atol=1e-2)
    np.testing.assert_allclose(float(loss), float(loss_ref), rtol=1e-2, atol=1e-2)

    print("KERNEL_OK")
</pallas_src>

<mosaic_0001>
module attributes {stable_mosaic.version = 11 : i64} {
  func.func @eer_gcn_kernel(%arg0: memref<2x32xf32, #tpu.memory_space<vmem>>, %arg1: memref<32x4xf32, #tpu.memory_space<vmem>>, %arg2: memref<4x32xf32, #tpu.memory_space<vmem>>, %arg3: memref<32x32xf32, #tpu.memory_space<vmem>>, %arg4: memref<96x128xf32, #tpu.memory_space<vmem>>, %arg5: memref<1x128xf32, #tpu.memory_space<vmem>>, %arg6: memref<1x4xf32, #tpu.memory_space<vmem>>, %arg7: memref<1x4xf32, #tpu.memory_space<vmem>>, %arg8: memref<128x32xf32, #tpu.memory_space<vmem>>, %arg9: memref<1x32xf32, #tpu.memory_space<vmem>>, %arg10: memref<32x3xf32, #tpu.memory_space<vmem>>, %arg11: memref<1x3xf32, #tpu.memory_space<vmem>>, %arg12: memref<2x3xf32, #tpu.memory_space<vmem>>, %arg13: memref<1x1xf32, #tpu.memory_space<vmem>>, %arg14: memref<2x3xf32, #tpu.memory_space<vmem>>, %arg15: memref<2x96xf32, #tpu.memory_space<vmem>>) attributes {dimension_semantics = [], scalar_prefetch = 0 : i64, scratch_operands = 1 : i64, tpu.core_type = #tpu.core_type<tc>} {
    %c0 = arith.constant 0 : index
    %c0_0 = arith.constant 0 : index
    %0 = vector.load %arg0[%c0, %c0_0] : memref<2x32xf32, #tpu.memory_space<vmem>>, vector<2x32xf32>
    %cst = arith.constant dense<0.000000e+00> : vector<32xf32>
    %1 = vector.multi_reduction <add>, %0, %cst [0] : vector<2x32xf32> to vector<32xf32>
    %2 = vector.shape_cast %1 : vector<32xf32> to vector<1x32xf32>
    %3 = arith.mulf %0, %0 : vector<2x32xf32>
    %cst_1 = arith.constant dense<0.000000e+00> : vector<32xf32>
    %4 = vector.multi_reduction <add>, %3, %cst_1 [0] : vector<2x32xf32> to vector<32xf32>
    %5 = vector.shape_cast %4 : vector<32xf32> to vector<1x32xf32>
    %c0_2 = arith.constant 0 : index
    %c0_3 = arith.constant 0 : index
    %6 = vector.load %arg1[%c0_2, %c0_3] : memref<32x4xf32, #tpu.memory_space<vmem>>, vector<32x4xf32>
    %cst_4 = arith.constant dense<0.000000e+00> : vector<1x4xf32>
    %7 = tpu.matmul %2, %6, %cst_4 {dimension_numbers = #tpu.dot_dimension_numbers<[1], [0], [0], [1], [0, 0, 1, 1], [], []>} : vector<1x32xf32>, vector<32x4xf32>, vector<1x4xf32> -> vector<1x4xf32>
    %c0_5 = arith.constant 0 : index
    %c0_6 = arith.constant 0 : index
    %8 = vector.load %arg1[%c0_5, %c0_6] : memref<32x4xf32, #tpu.memory_space<vmem>>, vector<32x4xf32>
    %cst_7 = arith.constant dense<0.000000e+00> : vector<1x4xf32>
    %9 = tpu.matmul %5, %8, %cst_7 {dimension_numbers = #tpu.dot_dimension_numbers<[1], [0], [0], [1], [0, 0, 1, 1], [], []>} : vector<1x32xf32>, vector<32x4xf32>, vector<1x4xf32> -> vector<1x4xf32>
    %cst_8 = arith.constant 6.250000e-02 : f32
    %10 = vector.broadcast %cst_8 : f32 to vector<1x4xf32>
    %11 = arith.mulf %7, %10 : vector<1x4xf32>
    %cst_9 = arith.constant 6.250000e-02 : f32
    %12 = vector.broadcast %cst_9 : f32 to vector<1x4xf32>
    %13 = arith.mulf %9, %12 : vector<1x4xf32>
    %14 = arith.mulf %11, %11 : vector<1x4xf32>
    %15 = arith.subf %13, %14 : vector<1x4xf32>
    %c0_10 = arith.constant 0 : index
    %c0_11 = arith.constant 0 : index
    %16 = vector.load %arg6[%c0_10, %c0_11] : memref<1x4xf32, #tpu.memory_space<vmem>>, vector<1x4xf32>
    %cst_12 = arith.constant 9.99999974E-6 : f32
    %17 = vector.broadcast %cst_12 : f32 to vector<1x4xf32>
    %18 = arith.addf %15, %17 : vector<1x4xf32>
    %19 = math.rsqrt %18 : vector<1x4xf32>
    %20 = arith.mulf %16, %19 : vector<1x4xf32>
    %c0_13 = arith.constant 0 : index
    %c0_14 = arith.constant 0 : index
    %21 = vector.load %arg7[%c0_13, %c0_14] : memref<1x4xf32, #tpu.memory_space<vmem>>, vector<1x4xf32>
    %22 = arith.mulf %11, %20 : vector<1x4xf32>
    %23 = arith.subf %21, %22 : vector<1x4xf32>
    %c0_15 = arith.constant 0 : index
    %c0_16 = arith.constant 0 : index
    %24 = vector.load %arg2[%c0_15, %c0_16] : memref<4x32xf32, #tpu.memory_space<vmem>>, vector<4x32xf32>
    %cst_17 = arith.constant dense<0.000000e+00> : vector<1x32xf32>
    %25 = tpu.matmul %20, %24, %cst_17 {dimension_numbers = #tpu.dot_dimension_numbers<[1], [0], [0], [1], [0, 0, 1, 1], [], []>} : vector<1x4xf32>, vector<4x32xf32>, vector<1x32xf32> -> vector<1x32xf32>
    %c0_18 = arith.constant 0 : index
    %c0_19 = arith.constant 0 : index
    %26 = vector.load %arg2[%c0_18, %c0_19] : memref<4x32xf32, #tpu.memory_space<vmem>>, vector<4x32xf32>
    %cst_20 = arith.constant dense<0.000000e+00> : vector<1x32xf32>
    %27 = tpu.matmul %23, %26, %cst_20 {dimension_numbers = #tpu.dot_dimension_numbers<[1], [0], [0], [1], [0, 0, 1, 1], [], []>} : vector<1x4xf32>, vector<4x32xf32>, vector<1x32xf32> -> vector<1x32xf32>
    %28 = vector.broadcast %25 : vector<1x32xf32> to vector<2x32xf32>
    %29 = arith.mulf %0, %28 : vector<2x32xf32>
    %30 = vector.broadcast %27 : vector<1x32xf32> to vector<2x32xf32>
    %31 = arith.addf %29, %30 : vector<2x32xf32>
    %cst_21 = arith.constant 0.000000e+00 : f32
    %32 = vector.broadcast %cst_21 : f32 to vector<2x32xf32>
    %33 = arith.cmpf ogt, %31, %32 : vector<2x32xf32>
    %cst_22 = arith.constant 1.500000e-01 : f32
    %34 = vector.broadcast %cst_22 : f32 to vector<2x32xf32>
    %35 = arith.mulf %34, %31 : vector<2x32xf32>
    %36 = arith.select %33, %31, %35 : vector<2x32xi1>, vector<2x32xf32>
    %c0_23 = arith.constant 0 : index
    %c0_24 = arith.constant 0 : index
    %37 = vector.load %arg3[%c0_23, %c0_24] : memref<32x32xf32, #tpu.memory_space<vmem>>, vector<32x32xf32>
    %c0_25 = arith.constant 0 : index
    %c0_26 = arith.constant 0 : index
    %38 = vector.load %arg15[%c0_25, %c0_26] : memref<2x96xf32, #tpu.memory_space<vmem>>, vector<2x32xf32>
    tpu.vector_store %arg15[%c0_25, %c0_26], %36 {strides = array<i32>} : memref<2x96xf32, #tpu.memory_space<vmem>>, vector<2x32xf32>,
    %cst_27 = arith.constant dense<0.000000e+00> : vector<2x32xf32>
    %39 = tpu.matmul %36, %37, %cst_27 {dimension_numbers = #tpu.dot_dimension_numbers<[1], [0], [0], [1], [0, 0, 1, 1], [], []>} : vector<2x32xf32>, vector<32x32xf32>, vector<2x32xf32> -> vector<2x32xf32>
    %c0_28 = arith.constant 0 : index
    %c32 = arith.constant 32 : index
    %40 = vector.load %arg15[%c0_28, %c32] : memref<2x96xf32, #tpu.memory_space<vmem>>, vector<2x32xf32>
    tpu.vector_store %arg15[%c0_28, %c32], %39 {strides = array<i32>} : memref<2x96xf32, #tpu.memory_space<vmem>>, vector<2x32xf32>,
    %cst_29 = arith.constant dense<0.000000e+00> : vector<2x32xf32>
    %41 = tpu.matmul %39, %37, %cst_29 {dimension_numbers = #tpu.dot_dimension_numbers<[1], [0], [0], [1], [0, 0, 1, 1], [], []>} : vector<2x32xf32>, vector<32x32xf32>, vector<2x32xf32> -> vector<2x32xf32>
    %cst_30 = arith.constant 2.000000e+00 : f32
    %42 = vector.broadcast %cst_30 : f32 to vector<2x32xf32>
    %43 = arith.mulf %42, %41 : vector<2x32xf32>
    %44 = arith.subf %43, %36 : vector<2x32xf32>
    %c0_31 = arith.constant 0 : index
    %c64 = arith.constant 64 : index
    %45 = vector.load %arg15[%c0_31, %c64] : memref<2x96xf32, #tpu.memory_space<vmem>>, vector<2x32xf32>
    tpu.vector_store %arg15[%c0_31, %c64], %44 {strides = array<i32>} : memref<2x96xf32, #tpu.memory_space<vmem>>, vector<2x32xf32>,
    %c0_32 = arith.constant 0 : index
    %c0_33 = arith.constant 0 : index
    %46 = vector.load %arg15[%c0_32, %c0_33] : memref<2x96xf32, #tpu.memory_space<vmem>>, vector<2x96xf32>
    %c0_34 = arith.constant 0 : index
    %c0_35 = arith.constant 0 : index
    %47 = vector.load %arg4[%c0_34, %c0_35] : memref<96x128xf32, #tpu.memory_space<vmem>>, vector<96x128xf32>
    %cst_36 = arith.constant dense<0.000000e+00> : vector<2x128xf32>
    %48 = tpu.matmul %46, %47, %cst_36 {dimension_numbers = #tpu.dot_dimension_numbers<[1], [0], [0], [1], [0, 0, 1, 1], [], []>} : vector<2x96xf32>, vector<96x128xf32>, vector<2x128xf32> -> vector<2x128xf32>
    %c0_37 = arith.constant 0 : index
    %c0_38 = arith.constant 0 : index
    %49 = vector.load %arg5[%c0_37, %c0_38] : memref<1x128xf32, #tpu.memory_space<vmem>>, vector<1x128xf32>
    %50 = vector.broadcast %49 : vector<1x128xf32> to vector<2x128xf32>
    %51 = arith.addf %48, %50 : vector<2x128xf32>
    %cst_39 = arith.constant 0.000000e+00 : f32
    %52 = vector.broadcast %cst_39 : f32 to vector<2x128xf32>
    %53 = arith.cmpf ogt, %51, %52 : vector<2x128xf32>
    %cst_40 = arith.constant 1.500000e-01 : f32
    %54 = vector.broadcast %cst_40 : f32 to vector<2x128xf32>
    %55 = arith.mulf %54, %51 : vector<2x128xf32>
    %56 = arith.select %53, %51, %55 : vector<2x128xi1>, vector<2x128xf32>
    %c0_41 = arith.constant 0 : index
    %c0_42 = arith.constant 0 : index
    %57 = vector.load %arg8[%c0_41, %c0_42] : memref<128x32xf32, #tpu.memory_space<vmem>>, vector<128x32xf32>
    %cst_43 = arith.constant dense<0.000000e+00> : vector<2x32xf32>
    %58 = tpu.matmul %56, %57, %cst_43 {dimension_numbers = #tpu.dot_dimension_numbers<[1], [0], [0], [1], [0, 0, 1, 1], [], []>} : vector<2x128xf32>, vector<128x32xf32>, vector<2x32xf32> -> vector<2x32xf32>
    %c0_44 = arith.constant 0 : index
    %c0_45 = arith.constant 0 : index
    %59 = vector.load %arg9[%c0_44, %c0_45] : memref<1x32xf32, #tpu.memory_space<vmem>>, vector<1x32xf32>
    %60 = vector.broadcast %59 : vector<1x32xf32> to vector<2x32xf32>
    %61 = arith.addf %58, %60 : vector<2x32xf32>
    %cst_46 = arith.constant 0.000000e+00 : f32
    %62 = vector.broadcast %cst_46 : f32 to vector<2x32xf32>
    %63 = arith.cmpf ogt, %61, %62 : vector<2x32xf32>
    %cst_47 = arith.constant 1.500000e-01 : f32
    %64 = vector.broadcast %cst_47 : f32 to vector<2x32xf32>
    %65 = arith.mulf %64, %61 : vector<2x32xf32>
    %66 = arith.select %63, %61, %65 : vector<2x32xi1>, vector<2x32xf32>
    %c0_48 = arith.constant 0 : index
    %c0_49 = arith.constant 0 : index
    %67 = vector.load %arg10[%c0_48, %c0_49] : memref<32x3xf32, #tpu.memory_space<vmem>>, vector<32x3xf32>
    %cst_50 = arith.constant dense<0.000000e+00> : vector<2x3xf32>
    %68 = tpu.matmul %66, %67, %cst_50 {dimension_numbers = #tpu.dot_dimension_numbers<[1], [0], [0], [1], [0, 0, 1, 1], [], []>} : vector<2x32xf32>, vector<32x3xf32>, vector<2x3xf32> -> vector<2x3xf32>
    %c0_51 = arith.constant 0 : index
    %c0_52 = arith.constant 0 : index
    %69 = vector.load %arg11[%c0_51, %c0_52] : memref<1x3xf32, #tpu.memory_space<vmem>>, vector<1x3xf32>
    %70 = vector.broadcast %69 : vector<1x3xf32> to vector<2x3xf32>
    %71 = arith.addf %68, %70 : vector<2x3xf32>
    %cst_53 = arith.constant dense<0xFF800000> : vector<2xf32>
    %72 = vector.multi_reduction <maximumf>, %71, %cst_53 [1] : vector<2x3xf32> to vector<2xf32>
    %73 = vector.shape_cast %72 : vector<2xf32> to vector<2x1xf32>
    %74 = vector.broadcast %73 : vector<2x1xf32> to vector<2x3xf32>
    %75 = arith.subf %71, %74 : vector<2x3xf32>
    %76 = math.exp %75 : vector<2x3xf32>
    %cst_54 = arith.constant dense<0.000000e+00> : vector<2xf32>
    %77 = vector.multi_reduction <add>, %76, %cst_54 [1] : vector<2x3xf32> to vector<2xf32>
    %78 = vector.shape_cast %77 : vector<2xf32> to vector<2x1xf32>
    %79 = tpu.reciprocal %78 {approx = true} : vector<2x1xf32> -> vector<2x1xf32>
    %80 = vector.broadcast %79 : vector<2x1xf32> to vector<2x3xf32>
    %81 = arith.mulf %76, %80 : vector<2x3xf32>
    %c0_55 = arith.constant 0 : index
    %c0_56 = arith.constant 0 : index
    %82 = vector.load %arg14[%c0_55, %c0_56] : memref<2x3xf32, #tpu.memory_space<vmem>>, vector<2x3xf32>
    tpu.vector_store %arg14[%c0_55, %c0_56], %81 {strides = array<i32>} : memref<2x3xf32, #tpu.memory_space<vmem>>, vector<2x3xf32>,
    %83 = vector.broadcast %73 : vector<2x1xf32> to vector<2x3xf32>
    %84 = arith.subf %71, %83 : vector<2x3xf32>
    %85 = math.log %78 : vector<2x1xf32>
    %86 = vector.broadcast %85 : vector<2x1xf32> to vector<2x3xf32>
    %87 = arith.subf %84, %86 : vector<2x3xf32>
    %c0_57 = arith.constant 0 : index
    %c0_58 = arith.constant 0 : index
    %88 = vector.load %arg12[%c0_57, %c0_58] : memref<2x3xf32, #tpu.memory_space<vmem>>, vector<2x3xf32>
    %89 = arith.mulf %88, %87 : vector<2x3xf32>
    %cst_59 = arith.constant dense<0.000000e+00> : vector<2xf32>
    %90 = vector.multi_reduction <add>, %89, %cst_59 [1] : vector<2x3xf32> to vector<2xf32>
    %91 = vector.shape_cast %90 : vector<2xf32> to vector<2x1xf32>
    %cst_60 = arith.constant 0.000000e+00 : f32
    %92 = vector.broadcast %cst_60 : f32 to vector<2x1xf32>
    %93 = arith.subf %92, %91 : vector<2x1xf32>
    %cst_61 = arith.constant dense<0.000000e+00> : vector<1xf32>
    %94 = vector.multi_reduction <add>, %93, %cst_61 [0] : vector<2x1xf32> to vector<1xf32>
    %95 = vector.shape_cast %94 : vector<1xf32> to vector<1x1xf32>
    %cst_62 = arith.constant 5.000000e-01 : f32
    %96 = vector.broadcast %cst_62 : f32 to vector<1x1xf32>
    %97 = arith.mulf %95, %96 : vector<1x1xf32>
    %c0_63 = arith.constant 0 : index
    %c0_64 = arith.constant 0 : index
    %98 = vector.load %arg13[%c0_63, %c0_64] : memref<1x1xf32, #tpu.memory_space<vmem>>, vector<1x1xf32>
    tpu.vector_store %arg13[%c0_63, %c0_64], %97 {strides = array<i32>} : memref<1x1xf32, #tpu.memory_space<vmem>>, vector<1x1xf32>,
    return
  }
}

</mosaic_0001>

<llo_original>
// kernel: tpu_custom_call.1
$region0: #{tpu_custom_call.1}
  #allocation0 [shape = 'u32[]', space=smem, size = 0x4, offset = 0x4, fixed_abs, tag = 'smem constant byte address 0x4 - core index']
  #allocation1 [shape = 'u32[144,128]{1,0:T(1,128)}', space=vmem, size = 0x12000, scoped, tag = 'internal scratch']
  #allocation2 [shape = 'f32[2,96]{1,0:T(2,128)}', space=vmem, size = 0x400, scoped, tag = 'scratch operand']
  %s0 = inlined_call_operand.vmem [shape: f32[2,32], index: 0, kind: input, shape index: {}]
  %s1 = inlined_call_operand.vmem [shape: f32[32,4], index: 1, kind: input, shape index: {}]
  %s2 = inlined_call_operand.vmem [shape: f32[4,32], index: 2, kind: input, shape index: {}]
  %s3 = inlined_call_operand.vmem [shape: f32[32,32], index: 3, kind: input, shape index: {}]
  %s4 = inlined_call_operand.vmem [shape: f32[96,128], index: 4, kind: input, shape index: {}]
  %s5 = inlined_call_operand.vmem [shape: f32[1,128], index: 5, kind: input, shape index: {}]
  %s6 = inlined_call_operand.vmem [shape: f32[1,4], index: 6, kind: input, shape index: {}]
  %s7 = inlined_call_operand.vmem [shape: f32[1,4], index: 7, kind: input, shape index: {}]
  %s8 = inlined_call_operand.vmem [shape: f32[128,32], index: 8, kind: input, shape index: {}]
  %s9 = inlined_call_operand.vmem [shape: f32[1,32], index: 9, kind: input, shape index: {}]
  %s10 = inlined_call_operand.vmem [shape: f32[32,3], index: 10, kind: input, shape index: {}]
  %s11 = inlined_call_operand.vmem [shape: f32[1,3], index: 11, kind: input, shape index: {}]
  %s12 = inlined_call_operand.vmem [shape: f32[2,3], index: 12, kind: input, shape index: {}]
  %s13 = inlined_call_operand.hbm [shape: f32[1,1], index: 13, kind: output, shape index: {0}]
  %s14 = inlined_call_operand.hbm [shape: f32[2,3], index: 14, kind: output, shape index: {1}]
  %15 = xla_tuple %s13, %s14
  %s16 = sld [smem:[#allocation0]]
  $region70: #{tpu_custom_call.1} parent=0
    _
  %s18 = ssub.s32 1, %s16
  %s19 = scalar_select 0, %s18, %s16
  $region1: #{tpu_custom_call.1} parent=0
    #allocation3 [shape = 'u8[512]{0}', space=vmem, size = 0x400, scoped, tag = 'output window, operand 0, single buffered']
    #allocation4 [shape = 's32[1]{0}', space=sflag, size = 0x4, scoped, tag = 'scoped memory for tpu_custom_call.1']
    #allocation5 [shape = 'u8[1024]{0}', space=vmem, size = 0x400, scoped, tag = 'output window, operand 1, single buffered']
    #allocation6 [shape = 's32[1]{0}', space=sflag, size = 0x4, scoped, tag = 'scoped memory for tpu_custom_call.1']
    %20 = vsyncpa [#allocation4], 0
    %21 = vsyncpa [#allocation6], 0
    // Predicated region
    $region2: #{tpu_custom_call.1} parent=1 // pred_check
      _
    $region3: #{tpu_custom_call.1} parent=1 // pred_check_branch
      %23 = sbr.rel (0) target = $region5
    $region4: #{tpu_custom_call.1} parent=1 // pred_region
      _
    $region5: #{tpu_custom_call.1} parent=1 // pred_fallthru
      _
    // Predicated region
    $region6: #{tpu_custom_call.1} parent=1 // pred_check
      _
    $region7: #{tpu_custom_call.1} parent=1 // pred_check_branch
      %25 = sbr.rel (0) target = $region9
    $region8: #{tpu_custom_call.1} parent=1 // pred_region
      _
    $region9: #{tpu_custom_call.1} parent=1 // pred_fallthru
      _
    // Predicated region
    $region10: #{tpu_custom_call.1} parent=1 // pred_check
      _
    $region11: #{tpu_custom_call.1} parent=1 // pred_check_branch
      %27 = sbr.rel (0) target = $region13
    $region12: #{tpu_custom_call.1} parent=1 // pred_region
      _
    $region13: #{tpu_custom_call.1} parent=1 // pred_fallthru
      _
    // Predicated region
    $region14: #{tpu_custom_call.1} parent=1 // pred_check
      _
    $region15: #{tpu_custom_call.1} parent=1 // pred_check_branch
      %29 = sbr.rel (0) target = $region17
    $region16: #{tpu_custom_call.1} parent=1 // pred_region
      _
    $region17: #{tpu_custom_call.1} parent=1 // pred_fallthru
      _
    // Predicated region
    $region18: #{tpu_custom_call.1} parent=1 // pred_check
      _
    $region19: #{tpu_custom_call.1} parent=1 // pred_check_branch
      %31 = sbr.rel (0) target = $region21
    $region20: #{tpu_custom_call.1} parent=1 // pred_region
      _
    $region21: #{tpu_custom_call.1} parent=1 // pred_fallthru
      _
    // Predicated region
    $region22: #{tpu_custom_call.1} parent=1 // pred_check
      _
    $region23: #{tpu_custom_call.1} parent=1 // pred_check_branch
      %33 = sbr.rel (0) target = $region25
    $region24: #{tpu_custom_call.1} parent=1 // pred_region
      _
    $region25: #{tpu_custom_call.1} parent=1 // pred_fallthru
      _
    // Predicated region
    $region26: #{tpu_custom_call.1} parent=1 // pred_check
      _
    $region27: #{tpu_custom_call.1} parent=1 // pred_check_branch
      %35 = sbr.rel (0) target = $region29
    $region28: #{tpu_custom_call.1} parent=1 // pred_region
      _
    $region29: #{tpu_custom_call.1} parent=1 // pred_fallthru
      _
    // Predicated region
    $region30: #{tpu_custom_call.1} parent=1 // pred_check
      _
    $region31: #{tpu_custom_call.1} parent=1 // pred_check_branch
      %37 = sbr.rel (0) target = $region33
    $region32: #{tpu_custom_call.1} parent=1 // pred_region
      _
    $region33: #{tpu_custom_call.1} parent=1 // pred_fallthru
      _
    // Predicated region
    $region34: #{tpu_custom_call.1} parent=1 // pred_check
      _
    $region35: #{tpu_custom_call.1} parent=1 // pred_check_branch
      %39 = sbr.rel (0) target = $region37
    $region36: #{tpu_custom_call.1} parent=1 // pred_region
      _
    $region37: #{tpu_custom_call.1} parent=1 // pred_fallthru
      _
    // Predicated region
    $region38: #{tpu_custom_call.1} parent=1 // pred_check
      _
    $region39: #{tpu_custom_call.1} parent=1 // pred_check_branch
      %41 = sbr.rel (0) target = $region41
    $region40: #{tpu_custom_call.1} parent=1 // pred_region
      _
    $region41: #{tpu_custom_call.1} parent=1 // pred_fallthru
      _
    // Predicated region
    $region42: #{tpu_custom_call.1} parent=1 // pred_check
      _
    $region43: #{tpu_custom_call.1} parent=1 // pred_check_branch
      %43 = sbr.rel (0) target = $region45
    $region44: #{tpu_custom_call.1} parent=1 // pred_region
      _
    $region45: #{tpu_custom_call.1} parent=1 // pred_fallthru
      _
    // Predicated region
    $region46: #{tpu_custom_call.1} parent=1 // pred_check
      _
    $region47: #{tpu_custom_call.1} parent=1 // pred_check_branch
      %45 = sbr.rel (0) target = $region49
    $region48: #{tpu_custom_call.1} parent=1 // pred_region
      _
    $region49: #{tpu_custom_call.1} parent=1 // pred_fallthru
      _
    // Predicated region
    $region50: #{tpu_custom_call.1} parent=1 // pred_check
      _
    $region51: #{tpu_custom_call.1} parent=1 // pred_check_branch
      %47 = sbr.rel (0) target = $region53
    $region52: #{tpu_custom_call.1} parent=1 // pred_region
      _
    $region53: #{tpu_custom_call.1} parent=1 // pred_fallthru
      _
    %v48 = vld [vmem:[%s0] sm:$0x3]
    %vm49 = vcmask 254976
    %v50 = vsel %vm49, %v48, 0.0
    %v51 = vrot.slane %v50, 4
    %v52 = vadd.f32 %v50, %v51
    %v53 = vrot.slane %v52, 2
    %v54 = vadd.f32 %v52, %v53
    %v55 = vrot.slane %v54, 1
    %v56 = vadd.f32 %v54, %v55
    %v57 = vmul.f32 %v48, %v48
    %v58 = vsel %vm49, %v57, 0.0
    %v59 = vrot.slane %v58, 4
    %v60 = vadd.f32 %v58, %v59
    %v61 = vrot.slane %v60, 2
    %v62 = vadd.f32 %v60, %v61
    %v63 = vrot.slane %v62, 1
    %v64 = vadd.f32 %v62, %v63
    %v65 = vld [vmem:[%s1] sm:$0xff]
    %v66 = vld [vmem:[%s1 + $0x8] sm:$0xff]
    %v67 = vld [vmem:[%s1 + $0x10] sm:$0xff]
    %v68 = vld [vmem:[%s1 + $0x18] sm:$0xff]
    %vm69 = vcmask 261120
    %v71 = vsel %vm69, %v56, 0
    %73 = vmatprep.subr.mxu0 0.0
    %74 = vmatpush1.msra.mxu0 %v65
    %75 = vmatprep.subr.mxu0 0.0
    %76 = vmatpush1.msra.mxu0 %v66
    %77 = vmatprep.subr.mxu0 0.0
    %78 = vmatpush1.msra.mxu0 %v67
    %79 = vmatprep.subr.mxu0 0.0
    %80 = vmatpush1.msra.mxu0 %v68
    %81 = vmatprep.subr.mxu0 0.0
    %82 = vmatpush1.msra.mxu0 0.0
    %83 = vmatprep.subr.mxu0 0.0
    %84 = vmatpush1.msra.mxu0 0.0
    %85 = vmatprep.subr.mxu0 0.0
    %86 = vmatpush1.msra.mxu0 0.0
    %87 = vmatprep.subr.mxu0 0.0
    %88 = vmatpush1.msra.mxu0 0.0
    %89 = vmatprep.subr.mxu0 0.0
    %90 = vmatpush1.msra.mxu0 0.0
    %91 = vmatprep.subr.mxu0 0.0
    %92 = vmatpush1.msra.mxu0 0.0
    %93 = vmatprep.subr.mxu0 0.0
    %94 = vmatpush1.msra.mxu0 0.0
    %95 = vmatprep.subr.mxu0 0.0
    %96 = vmatpush1.msra.mxu0 0.0
    %97 = vmatprep.subr.mxu0 0.0
    %98 = vmatpush1.msra.mxu0 0.0
    %99 = vmatprep.subr.mxu0 0.0
    %100 = vmatpush1.msra.mxu0 0.0
    %101 = vmatprep.subr.mxu0 0.0
    %102 = vmatpush1.msra.mxu0 0.0
    %103 = vmatprep.subr.mxu0 0.0
    %104 = vmatpush1.msra.mxu0 0.0
    %105 = vmatprep.subr.mxu0 0.0
    %106 = vmatpush1.msra.mxu0 0.0
    %107 = vmatprep.subr.mxu0 0.0
    %108 = vmatpush1.msra.mxu0 0.0
    %109 = vmatprep.subr.mxu0 0.0
    %110 = vmatpush1.msra.mxu0 0.0
    %111 = vmatprep.subr.mxu0 0.0
    %112 = vmatpush1.msra.mxu0 0.0
    %113 = vmatprep.subr.mxu0 0.0
    %114 = vmatpush1.msra.mxu0 0.0
    %115 = vmatprep.subr.mxu0 0.0
    %116 = vmatpush1.msra.mxu0 0.0
    %117 = vmatprep.subr.mxu0 0.0
    %118 = vmatpush1.msra.mxu0 0.0
    %119 = vmatprep.subr.mxu0 0.0
    %120 = vmatpush1.msra.mxu0 0.0
    %121 = vmatprep.subr.mxu0 0.0
    %122 = vmatpush1.msra.mxu0 0.0
    %123 = vmatprep.subr.mxu0 0.0
    %124 = vmatpush1.msra.mxu0 0.0
    %125 = vmatprep.subr.mxu0 0.0
    %126 = vmatpush1.msra.mxu0 0.0
    %127 = vmatprep.subr.mxu0 0.0
    %128 = vmatpush1.msra.mxu0 0.0
    %129 = vmatprep.subr.mxu0 0.0
    %130 = vmatpush1.msra.mxu0 0.0
    %131 = vmatprep.subr.mxu0 0.0
    %132 = vmatpush1.msra.mxu0 0.0
    %133 = vmatprep.subr.mxu0 0.0
    %134 = vmatpush1.msra.mxu0 0.0
    %135 = vmatprep.subr.mxu0 0.0
    %136 = vmatpush1.msra.mxu0 0.0
    %137 = vmatprep.mubr.f32.mxu0 0.0
    %138 = vmatmul.mubr.f32.gmra.mrb[0].mxu0 %v71
    %v139 = vpop.f32.mrb[0].mxu0
    %v140 = vadd.f32 0.0, %v139
    %v141 = vpop.f32.mrb[0].mxu0
    %142 = vdwg.mxu0
    %v144 = vsel %vm69, %v64, 0
    %146 = vmatprep.subr.mxu0 0.0
    %147 = vmatpush1.msra.mxu0 %v65
    %148 = vmatprep.subr.mxu0 0.0
    %149 = vmatpush1.msra.mxu0 %v66
    %150 = vmatprep.subr.mxu0 0.0
    %151 = vmatpush1.msra.mxu0 %v67
    %152 = vmatprep.subr.mxu0 0.0
    %153 = vmatpush1.msra.mxu0 %v68
    %154 = vmatprep.subr.mxu0 0.0
    %155 = vmatpush1.msra.mxu0 0.0
    %156 = vmatprep.subr.mxu0 0.0
    %157 = vmatpush1.msra.mxu0 0.0
    %158 = vmatprep.subr.mxu0 0.0
    %159 = vmatpush1.msra.mxu0 0.0
    %160 = vmatprep.subr.mxu0 0.0
    %161 = vmatpush1.msra.mxu0 0.0
    %162 = vmatprep.subr.mxu0 0.0
    %163 = vmatpush1.msra.mxu0 0.0
    %164 = vmatprep.subr.mxu0 0.0
    %165 = vmatpush1.msra.mxu0 0.0
    %166 = vmatprep.subr.mxu0 0.0
    %167 = vmatpush1.msra.mxu0 0.0
    %168 = vmatprep.subr.mxu0 0.0
    %169 = vmatpush1.msra.mxu0 0.0
    %170 = vmatprep.subr.mxu0 0.0
    %171 = vmatpush1.msra.mxu0 0.0
    %172 = vmatprep.subr.mxu0 0.0
    %173 = vmatpush1.msra.mxu0 0.0
    %174 = vmatprep.subr.mxu0 0.0
    %175 = vmatpush1.msra.mxu0 0.0
    %176 = vmatprep.subr.mxu0 0.0
    %177 = vmatpush1.msra.mxu0 0.0
    %178 = vmatprep.subr.mxu0 0.0
    %179 = vmatpush1.msra.mxu0 0.0
    %180 = vmatprep.subr.mxu0 0.0
    %181 = vmatpush1.msra.mxu0 0.0
    %182 = vmatprep.subr.mxu0 0.0
    %183 = vmatpush1.msra.mxu0 0.0
    %184 = vmatprep.subr.mxu0 0.0
    %185 = vmatpush1.msra.mxu0 0.0
    %186 = vmatprep.subr.mxu0 0.0
    %187 = vmatpush1.msra.mxu0 0.0
    %188 = vmatprep.subr.mxu0 0.0
    %189 = vmatpush1.msra.mxu0 0.0
    %190 = vmatprep.subr.mxu0 0.0
    %191 = vmatpush1.msra.mxu0 0.0
    %192 = vmatprep.subr.mxu0 0.0
    %193 = vmatpush1.msra.mxu0 0.0
    %194 = vmatprep.subr.mxu0 0.0
    %195 = vmatpush1.msra.mxu0 0.0
    %196 = vmatprep.subr.mxu0 0.0
    %197 = vmatpush1.msra.mxu0 0.0
    %198 = vmatprep.subr.mxu0 0.0
    %199 = vmatpush1.msra.mxu0 0.0
    %200 = vmatprep.subr.mxu0 0.0
    %201 = vmatpush1.msra.mxu0 0.0
    %202 = vmatprep.subr.mxu0 0.0
    %203 = vmatpush1.msra.mxu0 0.0
    %204 = vmatprep.subr.mxu0 0.0
    %205 = vmatpush1.msra.mxu0 0.0
    %206 = vmatprep.subr.mxu0 0.0
    %207 = vmatpush1.msra.mxu0 0.0
    %208 = vmatprep.subr.mxu0 0.0
    %209 = vmatpush1.msra.mxu0 0.0
    %210 = vmatprep.mubr.f32.mxu0 0.0
    %211 = vmatmul.mubr.f32.gmra.mrb[0].mxu0 %v144
    %v212 = vpop.f32.mrb[0].mxu0
    %v213 = vadd.f32 0.0, %v212
    %v214 = vpop.f32.mrb[0].mxu0
    %215 = vdwg.mxu0
    %v216 = vmul.f32 %v140, 0.0625
    %v217 = vmul.f32 %v213, 0.0625
    %v218 = vmul.f32 %v216, %v216
    %v219 = vsub.f32 %v217, %v218
    %v220 = vld [vmem:[%s6] sm:$0x1]
    %v221 = vadd.f32 %v219, 1e-05
    %v222 = vrsqrt.pop %v221
    %v223 = vmul.f32 %v220, %v222
    %v224 = vld [vmem:[%s7] sm:$0x1]
    %v225 = vmul.f32 %v216, %v223
    %v226 = vsub.f32 %v224, %v225
    %v227 = vld [vmem:[%s2] sm:$0xf]
    %vm228 = vcmask 31744
    %v230 = vsel %vm228, %v223, 0
    %vm232 = vcmask 1043456
    %v234 = vsel %vm232, %v227, 0
    %236 = vmatprep.subr.mxu0 0.0
    %237 = vmatpush1.msra.mxu0 %v234
    %238 = vmatprep.subr.mxu0 0.0
    %239 = vmatpush1.msra.mxu0 0.0
    %240 = vmatprep.subr.mxu0 0.0
    %241 = vmatpush1.msra.mxu0 0.0
    %242 = vmatprep.subr.mxu0 0.0
    %243 = vmatpush1.msra.mxu0 0.0
    %244 = vmatprep.subr.mxu0 0.0
    %245 = vmatpush1.msra.mxu0 0.0
    %246 = vmatprep.subr.mxu0 0.0
    %247 = vmatpush1.msra.mxu0 0.0
    %248 = vmatprep.subr.mxu0 0.0
    %249 = vmatpush1.msra.mxu0 0.0
    %250 = vmatprep.subr.mxu0 0.0
    %251 = vmatpush1.msra.mxu0 0.0
    %252 = vmatprep.subr.mxu0 0.0
    %253 = vmatpush1.msra.mxu0 0.0
    %254 = vmatprep.subr.mxu0 0.0
    %255 = vmatpush1.msra.mxu0 0.0
    %256 = vmatprep.subr.mxu0 0.0
    %257 = vmatpush1.msra.mxu0 0.0
    %258 = vmatprep.subr.mxu0 0.0
    %259 = vmatpush1.msra.mxu0 0.0
    %260 = vmatprep.subr.mxu0 0.0
    %261 = vmatpush1.msra.mxu0 0.0
    %262 = vmatprep.subr.mxu0 0.0
    %263 = vmatpush1.msra.mxu0 0.0
    %264 = vmatprep.subr.mxu0 0.0
    %265 = vmatpush1.msra.mxu0 0.0
    %266 = vmatprep.subr.mxu0 0.0
    %267 = vmatpush1.msra.mxu0 0.0
    %268 = vmatprep.subr.mxu0 0.0
    %269 = vmatpush1.msra.mxu0 0.0
    %270 = vmatprep.subr.mxu0 0.0
    %271 = vmatpush1.msra.mxu0 0.0
    %272 = vmatprep.subr.mxu0 0.0
    %273 = vmatpush1.msra.mxu0 0.0
    %274 = vmatprep.subr.mxu0 0.0
    %275 = vmatpush1.msra.mxu0 0.0
    %276 = vmatprep.subr.mxu0 0.0
    %277 = vmatpush1.msra.mxu0 0.0
    %278 = vmatprep.subr.mxu0 0.0
    %279 = vmatpush1.msra.mxu0 0.0
    %280 = vmatprep.subr.mxu0 0.0
    %281 = vmatpush1.msra.mxu0 0.0
    %282 = vmatprep.subr.mxu0 0.0
    %283 = vmatpush1.msra.mxu0 0.0
    %284 = vmatprep.subr.mxu0 0.0
    %285 = vmatpush1.msra.mxu0 0.0
    %286 = vmatprep.subr.mxu0 0.0
    %287 = vmatpush1.msra.mxu0 0.0
    %288 = vmatprep.subr.mxu0 0.0
    %289 = vmatpush1.msra.mxu0 0.0
    %290 = vmatprep.subr.mxu0 0.0
    %291 = vmatpush1.msra.mxu0 0.0
    %292 = vmatprep.subr.mxu0 0.0
    %293 = vmatpush1.msra.mxu0 0.0
    %294 = vmatprep.subr.mxu0 0.0
    %295 = vmatpush1.msra.mxu0 0.0
    %296 = vmatprep.subr.mxu0 0.0
    %297 = vmatpush1.msra.mxu0 0.0
    %298 = vmatprep.subr.mxu0 0.0
    %299 = vmatpush1.msra.mxu0 0.0
    %300 = vmatprep.mubr.f32.mxu0 0.0
    %301 = vmatmul.mubr.f32.gmra.mrb[0].mxu0 %v230
    %v302 = vpop.f32.mrb[0].mxu0
    %v303 = vadd.f32 0.0, %v302
    %v304 = vpop.f32.mrb[0].mxu0
    %305 = vdwg.mxu0
    %v307 = vsel %vm228, %v226, 0
    %309 = vmatprep.subr.mxu0 0.0
    %310 = vmatpush1.msra.mxu0 %v234
    %311 = vmatprep.subr.mxu0 0.0
    %312 = vmatpush1.msra.mxu0 0.0
    %313 = vmatprep.subr.mxu0 0.0
    %314 = vmatpush1.msra.mxu0 0.0
    %315 = vmatprep.subr.mxu0 0.0
    %316 = vmatpush1.msra.mxu0 0.0
    %317 = vmatprep.subr.mxu0 0.0
    %318 = vmatpush1.msra.mxu0 0.0
    %319 = vmatprep.subr.mxu0 0.0
    %320 = vmatpush1.msra.mxu0 0.0
    %321 = vmatprep.subr.mxu0 0.0
    %322 = vmatpush1.msra.mxu0 0.0
    %323 = vmatprep.subr.mxu0 0.0
    %324 = vmatpush1.msra.mxu0 0.0
    %325 = vmatprep.subr.mxu0 0.0
    %326 = vmatpush1.msra.mxu0 0.0
    %327 = vmatprep.subr.mxu0 0.0
    %328 = vmatpush1.msra.mxu0 0.0
    %329 = vmatprep.subr.mxu0 0.0
    %330 = vmatpush1.msra.mxu0 0.0
    %331 = vmatprep.subr.mxu0 0.0
    %332 = vmatpush1.msra.mxu0 0.0
    %333 = vmatprep.subr.mxu0 0.0
    %334 = vmatpush1.msra.mxu0 0.0
    %335 = vmatprep.subr.mxu0 0.0
    %336 = vmatpush1.msra.mxu0 0.0
    %337 = vmatprep.subr.mxu0 0.0
    %338 = vmatpush1.msra.mxu0 0.0
    %339 = vmatprep.subr.mxu0 0.0
    %340 = vmatpush1.msra.mxu0 0.0
    %341 = vmatprep.subr.mxu0 0.0
    %342 = vmatpush1.msra.mxu0 0.0
    %343 = vmatprep.subr.mxu0 0.0
    %344 = vmatpush1.msra.mxu0 0.0
    %345 = vmatprep.subr.mxu0 0.0
    %346 = vmatpush1.msra.mxu0 0.0
    %347 = vmatprep.subr.mxu0 0.0
    %348 = vmatpush1.msra.mxu0 0.0
    %349 = vmatprep.subr.mxu0 0.0
    %350 = vmatpush1.msra.mxu0 0.0
    %351 = vmatprep.subr.mxu0 0.0
    %352 = vmatpush1.msra.mxu0 0.0
    %353 = vmatprep.subr.mxu0 0.0
    %354 = vmatpush1.msra.mxu0 0.0
    %355 = vmatprep.subr.mxu0 0.0
    %356 = vmatpush1.msra.mxu0 0.0
    %357 = vmatprep.subr.mxu0 0.0
    %358 = vmatpush1.msra.mxu0 0.0
    %359 = vmatprep.subr.mxu0 0.0
    %360 = vmatpush1.msra.mxu0 0.0
    %361 = vmatprep.subr.mxu0 0.0
    %362 = vmatpush1.msra.mxu0 0.0
    %363 = vmatprep.subr.mxu0 0.0
    %364 = vmatpush1.msra.mxu0 0.0
    %365 = vmatprep.subr.mxu0 0.0
    %366 = vmatpush1.msra.mxu0 0.0
    %367 = vmatprep.subr.mxu0 0.0
    %368 = vmatpush1.msra.mxu0 0.0
    %369 = vmatprep.subr.mxu0 0.0
    %370 = vmatpush1.msra.mxu0 0.0
    %371 = vmatprep.subr.mxu0 0.0
    %372 = vmatpush1.msra.mxu0 0.0
    %373 = vmatprep.mubr.f32.mxu0 0.0
    %374 = vmatmul.mubr.f32.gmra.mrb[0].mxu0 %v307
    %v375 = vpop.f32.mrb[0].mxu0
    %v376 = vadd.f32 0.0, %v375
    %v377 = vpop.f32.mrb[0].mxu0
    %378 = vdwg.mxu0
    %v379 = vlaneseq
    %v380 = vshrl.u32 %v379, 7
    %v381 = vsub.s32 0, %v380
    %v382 = vrot.slane %v303, %v381
    %v383 = vmul.f32 %v48, %v382
    %v384 = vlaneseq
    %v385 = vshrl.u32 %v384, 7
    %v386 = vsub.s32 0, %v385
    %v387 = vrot.slane %v376, %v386
    %v388 = vadd.f32 %v383, %v387
    %vm389 = vcmp.gt.f32.partialorder %v388, 0.0
    %v390 = vmul.f32 %v388, 0.15
    %v391 = vsel %vm389, %v388, %v390
    %v392 = vld [vmem:[%s3] sm:$0xff]
    %v393 = vld [vmem:[%s3 + $0x8] sm:$0xff]
    %v394 = vld [vmem:[%s3 + $0x10] sm:$0xff]
    %v395 = vld [vmem:[%s3 + $0x18] sm:$0xff]
    %396 = vst.msk [vmem:[#allocation2] sm:$0x3] %vm49, %v391
    %v398 = vsel %vm69, %v391, 0
    %400 = vmatprep.subr.mxu0 0.0
    %401 = vmatpush1.msra.mxu0 %v392
    %402 = vmatprep.subr.mxu0 0.0
    %403 = vmatpush1.msra.mxu0 %v393
    %404 = vmatprep.subr.mxu0 0.0
    %405 = vmatpush1.msra.mxu0 %v394
    %406 = vmatprep.subr.mxu0 0.0
    %407 = vmatpush1.msra.mxu0 %v395
    %408 = vmatprep.subr.mxu0 0.0
    %409 = vmatpush1.msra.mxu0 0.0
    %410 = vmatprep.subr.mxu0 0.0
    %411 = vmatpush1.msra.mxu0 0.0
    %412 = vmatprep.subr.mxu0 0.0
    %413 = vmatpush1.msra.mxu0 0.0
    %414 = vmatprep.subr.mxu0 0.0
    %415 = vmatpush1.msra.mxu0 0.0
    %416 = vmatprep.subr.mxu0 0.0
    %417 = vmatpush1.msra.mxu0 0.0
    %418 = vmatprep.subr.mxu0 0.0
    %419 = vmatpush1.msra.mxu0 0.0
    %420 = vmatprep.subr.mxu0 0.0
    %421 = vmatpush1.msra.mxu0 0.0
    %422 = vmatprep.subr.mxu0 0.0
    %423 = vmatpush1.msra.mxu0 0.0
    %424 = vmatprep.subr.mxu0 0.0
    %425 = vmatpush1.msra.mxu0 0.0
    %426 = vmatprep.subr.mxu0 0.0
    %427 = vmatpush1.msra.mxu0 0.0
    %428 = vmatprep.subr.mxu0 0.0
    %429 = vmatpush1.msra.mxu0 0.0
    %430 = vmatprep.subr.mxu0 0.0
    %431 = vmatpush1.msra.mxu0 0.0
    %432 = vmatprep.subr.mxu0 0.0
    %433 = vmatpush1.msra.mxu0 0.0
    %434 = vmatprep.subr.mxu0 0.0
    %435 = vmatpush1.msra.mxu0 0.0
    %436 = vmatprep.subr.mxu0 0.0
    %437 = vmatpush1.msra.mxu0 0.0
    %438 = vmatprep.subr.mxu0 0.0
    %439 = vmatpush1.msra.mxu0 0.0
    %440 = vmatprep.subr.mxu0 0.0
    %441 = vmatpush1.msra.mxu0 0.0
    %442 = vmatprep.subr.mxu0 0.0
    %443 = vmatpush1.msra.mxu0 0.0
    %444 = vmatprep.subr.mxu0 0.0
    %445 = vmatpush1.msra.mxu0 0.0
    %446 = vmatprep.subr.mxu0 0.0
    %447 = vmatpush1.msra.mxu0 0.0
    %448 = vmatprep.subr.mxu0 0.0
    %449 = vmatpush1.msra.mxu0 0.0
    %450 = vmatprep.subr.mxu0 0.0
    %451 = vmatpush1.msra.mxu0 0.0
    %452 = vmatprep.subr.mxu0 0.0
    %453 = vmatpush1.msra.mxu0 0.0
    %454 = vmatprep.subr.mxu0 0.0
    %455 = vmatpush1.msra.mxu0 0.0
    %456 = vmatprep.subr.mxu0 0.0
    %457 = vmatpush1.msra.mxu0 0.0
    %458 = vmatprep.subr.mxu0 0.0
    %459 = vmatpush1.msra.mxu0 0.0
    %460 = vmatprep.subr.mxu0 0.0
    %461 = vmatpush1.msra.mxu0 0.0
    %462 = vmatprep.subr.mxu0 0.0
    %463 = vmatpush1.msra.mxu0 0.0
    %464 = vmatprep.mubr.f32.mxu0 0.0
    %465 = vmatmul.mubr.f32.gmra.mrb[0].mxu0 %v398
    %v466 = vpop.f32.mrb[0].mxu0
    %v467 = vadd.f32 0.0, %v466
    %v468 = vpop.f32.mrb[0].mxu0
    %469 = vdwg.mxu0
    %471 = vrot.lane.b32.xlu0 %v467, 32
    %v472 = vpop.permute.xlu0 %471
    %vm474 = vcmask 517376
    %475 = vst.msk [vmem:[#allocation2] sm:$0x3] %vm474, %v472
    %v476 = vsel %vm69, %v467, 0
    %478 = vmatprep.subr.mxu0 0.0
    %479 = vmatpush1.msra.mxu0 %v392
    %480 = vmatprep.subr.mxu0 0.0
    %481 = vmatpush1.msra.mxu0 %v393
    %482 = vmatprep.subr.mxu0 0.0
    %483 = vmatpush1.msra.mxu0 %v394
    %484 = vmatprep.subr.mxu0 0.0
    %485 = vmatpush1.msra.mxu0 %v395
    %486 = vmatprep.subr.mxu0 0.0
    %487 = vmatpush1.msra.mxu0 0.0
    %488 = vmatprep.subr.mxu0 0.0
    %489 = vmatpush1.msra.mxu0 0.0
    %490 = vmatprep.subr.mxu0 0.0
    %491 = vmatpush1.msra.mxu0 0.0
    %492 = vmatprep.subr.mxu0 0.0
    %493 = vmatpush1.msra.mxu0 0.0
    %494 = vmatprep.subr.mxu0 0.0
    %495 = vmatpush1.msra.mxu0 0.0
    %496 = vmatprep.subr.mxu0 0.0
    %497 = vmatpush1.msra.mxu0 0.0
    %498 = vmatprep.subr.mxu0 0.0
    %499 = vmatpush1.msra.mxu0 0.0
    %500 = vmatprep.subr.mxu0 0.0
    %501 = vmatpush1.msra.mxu0 0.0
    %502 = vmatprep.subr.mxu0 0.0
    %503 = vmatpush1.msra.mxu0 0.0
    %504 = vmatprep.subr.mxu0 0.0
    %505 = vmatpush1.msra.mxu0 0.0
    %506 = vmatprep.subr.mxu0 0.0
    %507 = vmatpush1.msra.mxu0 0.0
    %508 = vmatprep.subr.mxu0 0.0
    %509 = vmatpush1.msra.mxu0 0.0
    %510 = vmatprep.subr.mxu0 0.0
    %511 = vmatpush1.msra.mxu0 0.0
    %512 = vmatprep.subr.mxu0 0.0
    %513 = vmatpush1.msra.mxu0 0.0
    %514 = vmatprep.subr.mxu0 0.0
    %515 = vmatpush1.msra.mxu0 0.0
    %516 = vmatprep.subr.mxu0 0.0
    %517 = vmatpush1.msra.mxu0 0.0
    %518 = vmatprep.subr.mxu0 0.0
    %519 = vmatpush1.msra.mxu0 0.0
    %520 = vmatprep.subr.mxu0 0.0
    %521 = vmatpush1.msra.mxu0 0.0
    %522 = vmatprep.subr.mxu0 0.0
    %523 = vmatpush1.msra.mxu0 0.0
    %524 = vmatprep.subr.mxu0 0.0
    %525 = vmatpush1.msra.mxu0 0.0
    %526 = vmatprep.subr.mxu0 0.0
    %527 = vmatpush1.msra.mxu0 0.0
    %528 = vmatprep.subr.mxu0 0.0
    %529 = vmatpush1.msra.mxu0 0.0
    %530 = vmatprep.subr.mxu0 0.0
    %531 = vmatpush1.msra.mxu0 0.0
    %532 = vmatprep.subr.mxu0 0.0
    %533 = vmatpush1.msra.mxu0 0.0
    %534 = vmatprep.subr.mxu0 0.0
    %535 = vmatpush1.msra.mxu0 0.0
    %536 = vmatprep.subr.mxu0 0.0
    %537 = vmatpush1.msra.mxu0 0.0
    %538 = vmatprep.subr.mxu0 0.0
    %539 = vmatpush1.msra.mxu0 0.0
    %540 = vmatprep.subr.mxu0 0.0
    %541 = vmatpush1.msra.mxu0 0.0
    %542 = vmatprep.mubr.f32.mxu0 0.0
    %543 = vmatmul.mubr.f32.gmra.mrb[0].mxu0 %v476
    %v544 = vpop.f32.mrb[0].mxu0
    %v545 = vadd.f32 0.0, %v544
    %v546 = vpop.f32.mrb[0].mxu0
    %547 = vdwg.mxu0
    %v548 = vmul.f32 %v545, 2.0
    %v549 = vsub.f32 %v548, %v391
    %551 = vrot.lane.b32.xlu0 %v549, 64
    %v552 = vpop.permute.xlu0 %551
    %vm554 = vcmask 779776
    %555 = vst.msk [vmem:[#allocation2] sm:$0x3] %vm554, %v552
    %v556 = vld [vmem:[#allocation2] sm:$0x3]
    %v557 = vld [vmem:[%s4] sm:$0xff]
    %v558 = vld [vmem:[%s4 + $0x8] sm:$0xff]
    %v559 = vld [vmem:[%s4 + $0x10] sm:$0xff]
    %v560 = vld [vmem:[%s4 + $0x18] sm:$0xff]
    %v561 = vld [vmem:[%s4 + $0x20] sm:$0xff]
    %v562 = vld [vmem:[%s4 + $0x28] sm:$0xff]
    %v563 = vld [vmem:[%s4 + $0x30] sm:$0xff]
    %v564 = vld [vmem:[%s4 + $0x38] sm:$0xff]
    %v565 = vld [vmem:[%s4 + $0x40] sm:$0xff]
    %v566 = vld [vmem:[%s4 + $0x48] sm:$0xff]
    %v567 = vld [vmem:[%s4 + $0x50] sm:$0xff]
    %v568 = vld [vmem:[%s4 + $0x58] sm:$0xff]
    %v569 = vld [vmem:[%s5] sm:$0x1]
    %v571 = vlaneseq
    %v572 = vshrl.u32 %v571, 7
    %v573 = vsub.s32 0, %v572
    %v574 = vrot.slane %v569, %v573
    %vm576 = vcmask 785408
    %v578 = vsel %vm576, %v556, 0
    %580 = vmatprep.subr.mxu0 0.0
    %581 = vmatpush1.msra.mxu0 %v557
    %582 = vmatprep.subr.mxu0 0.0
    %583 = vmatpush1.msra.mxu0 %v558
    %584 = vmatprep.subr.mxu0 0.0
    %585 = vmatpush1.msra.mxu0 %v559
    %586 = vmatprep.subr.mxu0 0.0
    %587 = vmatpush1.msra.mxu0 %v560
    %588 = vmatprep.subr.mxu0 0.0
    %589 = vmatpush1.msra.mxu0 %v561
    %590 = vmatprep.subr.mxu0 0.0
    %591 = vmatpush1.msra.mxu0 %v562
    %592 = vmatprep.subr.mxu0 0.0
    %593 = vmatpush1.msra.mxu0 %v563
    %594 = vmatprep.subr.mxu0 0.0
    %595 = vmatpush1.msra.mxu0 %v564
    %596 = vmatprep.subr.mxu0 0.0
    %597 = vmatpush1.msra.mxu0 %v565
    %598 = vmatprep.subr.mxu0 0.0
    %599 = vmatpush1.msra.mxu0 %v566
    %600 = vmatprep.subr.mxu0 0.0
    %601 = vmatpush1.msra.mxu0 %v567
    %602 = vmatprep.subr.mxu0 0.0
    %603 = vmatpush1.msra.mxu0 %v568
    %604 = vmatprep.subr.mxu0 0.0
    %605 = vmatpush1.msra.mxu0 0.0
    %606 = vmatprep.subr.mxu0 0.0
    %607 = vmatpush1.msra.mxu0 0.0
    %608 = vmatprep.subr.mxu0 0.0
    %609 = vmatpush1.msra.mxu0 0.0
    %610 = vmatprep.subr.mxu0 0.0
    %611 = vmatpush1.msra.mxu0 0.0
    %612 = vmatprep.subr.mxu0 0.0
    %613 = vmatpush1.msra.mxu0 0.0
    %614 = vmatprep.subr.mxu0 0.0
    %615 = vmatpush1.msra.mxu0 0.0
    %616 = vmatprep.subr.mxu0 0.0
    %617 = vmatpush1.msra.mxu0 0.0
    %618 = vmatprep.subr.mxu0 0.0
    %619 = vmatpush1.msra.mxu0 0.0
    %620 = vmatprep.subr.mxu0 0.0
    %621 = vmatpush1.msra.mxu0 0.0
    %622 = vmatprep.subr.mxu0 0.0
    %623 = vmatpush1.msra.mxu0 0.0
    %624 = vmatprep.subr.mxu0 0.0
    %625 = vmatpush1.msra.mxu0 0.0
    %626 = vmatprep.subr.mxu0 0.0
    %627 = vmatpush1.msra.mxu0 0.0
    %628 = vmatprep.subr.mxu0 0.0
    %629 = vmatpush1.msra.mxu0 0.0
    %630 = vmatprep.subr.mxu0 0.0
    %631 = vmatpush1.msra.mxu0 0.0
    %632 = vmatprep.subr.mxu0 0.0
    %633 = vmatpush1.msra.mxu0 0.0
    %634 = vmatprep.subr.mxu0 0.0
    %635 = vmatpush1.msra.mxu0 0.0
    %636 = vmatprep.subr.mxu0 0.0
    %637 = vmatpush1.msra.mxu0 0.0
    %638 = vmatprep.subr.mxu0 0.0
    %639 = vmatpush1.msra.mxu0 0.0
    %640 = vmatprep.subr.mxu0 0.0
    %641 = vmatpush1.msra.mxu0 0.0
    %642 = vmatprep.subr.mxu0 0.0
    %643 = vmatpush1.msra.mxu0 0.0
    %644 = vmatprep.mubr.f32.mxu0 0.0
    %645 = vmatmul.mubr.f32.gmra.mrb[0].mxu0 %v578
    %v646 = vpop.f32.mrb[0].mxu0
    %v647 = vadd.f32 %v574, %v646
    %v648 = vpop.f32.mrb[0].mxu0
    %649 = vdwg.mxu0
    %vm650 = vcmp.gt.f32.partialorder %v647, 0.0
    %v651 = vmul.f32 %v647, 0.15
    %v652 = vsel %vm650, %v647, %v651
    %v653 = vld [vmem:[%s8] sm:$0xff]
    %v654 = vld [vmem:[%s8 + $0x8] sm:$0xff]
    %v655 = vld [vmem:[%s8 + $0x10] sm:$0xff]
    %v656 = vld [vmem:[%s8 + $0x18] sm:$0xff]
    %v657 = vld [vmem:[%s8 + $0x20] sm:$0xff]
    %v658 = vld [vmem:[%s8 + $0x28] sm:$0xff]
    %v659 = vld [vmem:[%s8 + $0x30] sm:$0xff]
    %v660 = vld [vmem:[%s8 + $0x38] sm:$0xff]
    %v661 = vld [vmem:[%s8 + $0x40] sm:$0xff]
    %v662 = vld [vmem:[%s8 + $0x48] sm:$0xff]
    %v663 = vld [vmem:[%s8 + $0x50] sm:$0xff]
    %v664 = vld [vmem:[%s8 + $0x58] sm:$0xff]
    %v665 = vld [vmem:[%s8 + $0x60] sm:$0xff]
    %v666 = vld [vmem:[%s8 + $0x68] sm:$0xff]
    %v667 = vld [vmem:[%s8 + $0x70] sm:$0xff]
    %v668 = vld [vmem:[%s8 + $0x78] sm:$0xff]
    %v669 = vld [vmem:[%s9] sm:$0x1]
    %v671 = vlaneseq
    %v672 = vshrl.u32 %v671, 7
    %v673 = vsub.s32 0, %v672
    %v674 = vrot.slane %v669, %v673
    %676 = vmatprep.subr.mxu0 0.0
    %677 = vmatpush1.msra.mxu0 %v653
    %678 = vmatprep.subr.mxu0 0.0
    %679 = vmatpush1.msra.mxu0 %v654
    %680 = vmatprep.subr.mxu0 0.0
    %681 = vmatpush1.msra.mxu0 %v655
    %682 = vmatprep.subr.mxu0 0.0
    %683 = vmatpush1.msra.mxu0 %v656
    %684 = vmatprep.subr.mxu0 0.0
    %685 = vmatpush1.msra.mxu0 %v657
    %686 = vmatprep.subr.mxu0 0.0
    %687 = vmatpush1.msra.mxu0 %v658
    %688 = vmatprep.subr.mxu0 0.0
    %689 = vmatpush1.msra.mxu0 %v659
    %690 = vmatprep.subr.mxu0 0.0
    %691 = vmatpush1.msra.mxu0 %v660
    %692 = vmatprep.subr.mxu0 0.0
    %693 = vmatpush1.msra.mxu0 %v661
    %694 = vmatprep.subr.mxu0 0.0
    %695 = vmatpush1.msra.mxu0 %v662
    %696 = vmatprep.subr.mxu0 0.0
    %697 = vmatpush1.msra.mxu0 %v663
    %698 = vmatprep.subr.mxu0 0.0
    %699 = vmatpush1.msra.mxu0 %v664
    %700 = vmatprep.subr.mxu0 0.0
    %701 = vmatpush1.msra.mxu0 %v665
    %702 = vmatprep.subr.mxu0 0.0
    %703 = vmatpush1.msra.mxu0 %v666
    %704 = vmatprep.subr.mxu0 0.0
    %705 = vmatpush1.msra.mxu0 %v667
    %706 = vmatprep.subr.mxu0 0.0
    %707 = vmatpush1.msra.mxu0 %v668
    %708 = vmatprep.subr.mxu0 0.0
    %709 = vmatpush1.msra.mxu0 0.0
    %710 = vmatprep.subr.mxu0 0.0
    %711 = vmatpush1.msra.mxu0 0.0
    %712 = vmatprep.subr.mxu0 0.0
    %713 = vmatpush1.msra.mxu0 0.0
    %714 = vmatprep.subr.mxu0 0.0
    %715 = vmatpush1.msra.mxu0 0.0
    %716 = vmatprep.subr.mxu0 0.0
    %717 = vmatpush1.msra.mxu0 0.0
    %718 = vmatprep.subr.mxu0 0.0
    %719 = vmatpush1.msra.mxu0 0.0
    %720 = vmatprep.subr.mxu0 0.0
    %721 = vmatpush1.msra.mxu0 0.0
    %722 = vmatprep.subr.mxu0 0.0
    %723 = vmatpush1.msra.mxu0 0.0
    %724 = vmatprep.subr.mxu0 0.0
    %725 = vmatpush1.msra.mxu0 0.0
    %726 = vmatprep.subr.mxu0 0.0
    %727 = vmatpush1.msra.mxu0 0.0
    %728 = vmatprep.subr.mxu0 0.0
    %729 = vmatpush1.msra.mxu0 0.0
    %730 = vmatprep.subr.mxu0 0.0
    %731 = vmatpush1.msra.mxu0 0.0
    %732 = vmatprep.subr.mxu0 0.0
    %733 = vmatpush1.msra.mxu0 0.0
    %734 = vmatprep.subr.mxu0 0.0
    %735 = vmatpush1.msra.mxu0 0.0
    %736 = vmatprep.subr.mxu0 0.0
    %737 = vmatpush1.msra.mxu0 0.0
    %738 = vmatprep.subr.mxu0 0.0
    %739 = vmatpush1.msra.mxu0 0.0
    %740 = vmatprep.mubr.f32.mxu0 0.0
    %741 = vmatmul.mubr.f32.gmra.mrb[0].mxu0 %v652
    %v742 = vpop.f32.mrb[0].mxu0
    %v743 = vadd.f32 %v674, %v742
    %v744 = vpop.f32.mrb[0].mxu0
    %745 = vdwg.mxu0
    %vm746 = vcmp.gt.f32.partialorder %v743, 0.0
    %v747 = vmul.f32 %v743, 0.15
    %v748 = vsel %vm746, %v743, %v747
    %v749 = vld [vmem:[%s10] sm:$0xff]
    %v750 = vld [vmem:[%s10 + $0x8] sm:$0xff]
    %v751 = vld [vmem:[%s10 + $0x10] sm:$0xff]
    %v752 = vld [vmem:[%s10 + $0x18] sm:$0xff]
    %v753 = vld [vmem:[%s11] sm:$0x1]
    %v755 = vlaneseq
    %v756 = vshrl.u32 %v755, 7
    %v757 = vsub.s32 0, %v756
    %v758 = vrot.slane %v753, %v757
    %v761 = vsel %vm69, %v748, 0
    %763 = vmatprep.subr.mxu0 0.0
    %764 = vmatpush1.msra.mxu0 %v749
    %765 = vmatprep.subr.mxu0 0.0
    %766 = vmatpush1.msra.mxu0 %v750
    %767 = vmatprep.subr.mxu0 0.0
    %768 = vmatpush1.msra.mxu0 %v751
    %769 = vmatprep.subr.mxu0 0.0
    %770 = vmatpush1.msra.mxu0 %v752
    %771 = vmatprep.subr.mxu0 0.0
    %772 = vmatpush1.msra.mxu0 0.0
    %773 = vmatprep.subr.mxu0 0.0
    %774 = vmatpush1.msra.mxu0 0.0
    %775 = vmatprep.subr.mxu0 0.0
    %776 = vmatpush1.msra.mxu0 0.0
    %777 = vmatprep.subr.mxu0 0.0
    %778 = vmatpush1.msra.mxu0 0.0
    %779 = vmatprep.subr.mxu0 0.0
    %780 = vmatpush1.msra.mxu0 0.0
    %781 = vmatprep.subr.mxu0 0.0
    %782 = vmatpush1.msra.mxu0 0.0
    %783 = vmatprep.subr.mxu0 0.0
    %784 = vmatpush1.msra.mxu0 0.0
    %785 = vmatprep.subr.mxu0 0.0
    %786 = vmatpush1.msra.mxu0 0.0
    %787 = vmatprep.subr.mxu0 0.0
    %788 = vmatpush1.msra.mxu0 0.0
    %789 = vmatprep.subr.mxu0 0.0
    %790 = vmatpush1.msra.mxu0 0.0
    %791 = vmatprep.subr.mxu0 0.0
    %792 = vmatpush1.msra.mxu0 0.0
    %793 = vmatprep.subr.mxu0 0.0
    %794 = vmatpush1.msra.mxu0 0.0
    %795 = vmatprep.subr.mxu0 0.0
    %796 = vmatpush1.msra.mxu0 0.0
    %797 = vmatprep.subr.mxu0 0.0
    %798 = vmatpush1.msra.mxu0 0.0
    %799 = vmatprep.subr.mxu0 0.0
    %800 = vmatpush1.msra.mxu0 0.0
    %801 = vmatprep.subr.mxu0 0.0
    %802 = vmatpush1.msra.mxu0 0.0
    %803 = vmatprep.subr.mxu0 0.0
    %804 = vmatpush1.msra.mxu0 0.0
    %805 = vmatprep.subr.mxu0 0.0
    %806 = vmatpush1.msra.mxu0 0.0
    %807 = vmatprep.subr.mxu0 0.0
    %808 = vmatpush1.msra.mxu0 0.0
    %809 = vmatprep.subr.mxu0 0.0
    %810 = vmatpush1.msra.mxu0 0.0
    %811 = vmatprep.subr.mxu0 0.0
    %812 = vmatpush1.msra.mxu0 0.0
    %813 = vmatprep.subr.mxu0 0.0
    %814 = vmatpush1.msra.mxu0 0.0
    %815 = vmatprep.subr.mxu0 0.0
    %816 = vmatpush1.msra.mxu0 0.0
    %817 = vmatprep.subr.mxu0 0.0
    %818 = vmatpush1.msra.mxu0 0.0
    %819 = vmatprep.subr.mxu0 0.0
    %820 = vmatpush1.msra.mxu0 0.0
    %821 = vmatprep.subr.mxu0 0.0
    %822 = vmatpush1.msra.mxu0 0.0
    %823 = vmatprep.subr.mxu0 0.0
    %824 = vmatpush1.msra.mxu0 0.0
    %825 = vmatprep.subr.mxu0 0.0
    %826 = vmatpush1.msra.mxu0 0.0
    %827 = vmatprep.mubr.f32.mxu0 0.0
    %828 = vmatmul.mubr.f32.gmra.mrb[0].mxu0 %v761
    %v829 = vpop.f32.mrb[0].mxu0
    %v830 = vadd.f32 %v758, %v829
    %v831 = vpop.f32.mrb[0].mxu0
    %832 = vdwg.mxu0
    %vm833 = vcmask 17408
    %v834 = vsel %vm833, %v830, -inf
    %835 = vmax.xlane.f32.xlu0 %v834
    %v836 = vpop.xlane.xlu0 %835
    %v837 = vsub.f32 %v830, %v836
    %v838 = vmul.f32 %v837, 1.442695
    %v839 = vpow.pop %v838
    %v840 = vsel %vm833, %v839, 0.0
    %841 = vadd.xlane.f32.xlu0 %v840
    %v842 = vpop.xlane.xlu0 %841
    %v843 = vrcp.pop %v842
    %v844 = vmul.f32 %v839, %v843
    %845 = vst.msk [vmem:[#allocation5] sm:$0x3] %vm833, %v844
    %v846 = vlog2.pop %v842
    %v847 = vmul.f32 %v846, 0.6931472
    %v848 = vsub.f32 %v837, %v847
    %v849 = vld [vmem:[%s12] sm:$0x3]
    %v850 = vmul.f32 %v849, %v848
    %v851 = vsel %vm833, %v850, 0.0
    %852 = vadd.xlane.f32.xlu0 %v851
    %v853 = vpop.xlane.xlu0 %852
    %v854 = vsub.f32 0.0, %v853
    %vm855 = vcmask 1041408
    %v856 = vsel %vm855, %v854, 0.0
    %v857 = vrot.slane %v856, 4
    %v858 = vadd.f32 %v856, %v857
    %v859 = vrot.slane %v858, 2
    %v860 = vadd.f32 %v858, %v859
    %v861 = vrot.slane %v860, 1
    %v862 = vadd.f32 %v860, %v861
    %v863 = vmul.f32 %v862, 0.5
    %vm864 = vcmask 0
    %865 = vst.msk [vmem:[#allocation3] sm:$0x1] %vm864, %v863
    // Predicated region
    $region54: #{tpu_custom_call.1} parent=1 // pred_check
      _
    $region55: #{tpu_custom_call.1} parent=1 // pred_check_branch
      %867 = sbr.rel (0) target = $region57
    $region56: #{tpu_custom_call.1} parent=1 // pred_region
      %s869 = ssub.s32 16, 16
      %870 = vsyncadd [#allocation4], %s869
      %s872 = sshll.u32 [#allocation3], 4
      %s873 = int_to_ptr.vmem [resolvable:$true] %s872
      %875 = dma.vmem_to_hbm [thread:$0]  %s873, 16, %s13, [#allocation4]
    $region57: #{tpu_custom_call.1} parent=1 // pred_fallthru
      _
    // Predicated region
    $region58: #{tpu_custom_call.1} parent=1 // pred_check
      _
    $region59: #{tpu_custom_call.1} parent=1 // pred_check_branch
      %877 = sbr.rel (0) target = $region61
    $region60: #{tpu_custom_call.1} parent=1 // pred_region
      %s879 = ssub.s32 32, 32
      %880 = vsyncadd [#allocation6], %s879
      %s882 = sshll.u32 [#allocation5], 4
      %s883 = int_to_ptr.vmem [resolvable:$true] %s882
      %885 = dma.vmem_to_hbm [thread:$0]  %s883, 32, %s14, [#allocation6]
    $region61: #{tpu_custom_call.1} parent=1 // pred_fallthru
      _
    // Predicated region
    $region62: #{tpu_custom_call.1} parent=1 // pred_check
      _
    $region63: #{tpu_custom_call.1} parent=1 // pred_check_branch
      %887 = sbr.rel (0) target = $region65
    $region64: #{tpu_custom_call.1} parent=1 // pred_region
      %888 = dma.done [#allocation4], 16
    $region65: #{tpu_custom_call.1} parent=1 // pred_fallthru
      _
    // Predicated region
    $region66: #{tpu_custom_call.1} parent=1 // pred_check
      _
    $region67: #{tpu_custom_call.1} parent=1 // pred_check_branch
      %890 = sbr.rel (0) target = $region69
    $region68: #{tpu_custom_call.1} parent=1 // pred_region
      %891 = dma.done [#allocation6], 32
    $region69: #{tpu_custom_call.1} parent=1 // pred_fallthru
      _
    %892 = vsyncpa [#allocation4], 1
    %893 = vsyncpa [#allocation6], 1

</llo_original>
